<compile_context>
chip_gen: v7x
topology: tpu7x:2x2x1
jax: 0.10.0
libtpu: 0.0.40
codegen_flags: <defaults>
</compile_context>

<pallas_src>
import functools

import jax
import jax.numpy as jnp
import numpy as np
from jax import lax
from jax.experimental import pallas as pl
from jax.experimental.pallas import tpu as pltpu


def _round_up(x, m):
    return (x + m - 1) // m * m


def _cdiv(a, b):
    return (a + b - 1) // b


def _loss_kernel(valid_emb_rows, valid_pred_rows,
                 anchor_ref, pos_ref, neg_ref, preds_ref, target_ref,
                 trip_ref, ce_ref, acc_ref):
    """Row-tiled partial sums for the triplet and cross-entropy terms.

    grid = (num_splits, tiles_per_split); outer axis "parallel" (megacore),
    inner axis is the streaming reduction over row tiles.
    """
    c = pl.program_id(0)
    k = pl.program_id(1)
    nk = pl.num_programs(1)
    tile = c * nk + k

    @pl.when(k == 0)
    def _init():
        acc_ref[0] = jnp.float32(0.0)
        acc_ref[1] = jnp.float32(0.0)

    # ---- Reciprocal triplet term (per-row squared distances) ----
    a = anchor_ref[...].astype(jnp.float32)            # (tb, D)
    p = pos_ref[...].astype(jnp.float32)
    n = neg_ref[...].astype(jnp.float32)
    tb = a.shape[0]

    d_ap = a - p
    d_an = a - n
    ap = jnp.sum(d_ap * d_ap, axis=1, keepdims=True)   # (tb, 1)
    an = jnp.sum(d_an * d_an, axis=1, keepdims=True)   # (tb, 1)
    trip = ap + 1.0 / an                                # (tb, 1)

    emb_row = tile * tb + lax.broadcasted_iota(jnp.int32, (tb, 1), 0)
    trip = jnp.where(emb_row < valid_emb_rows, trip, 0.0)   # mask pad rows
    trip_sum = jnp.sum(trip)

    # ---- Cross-entropy: sum of per-row (logsumexp - correct_logit) ----
    logits = preds_ref[...].astype(jnp.float32)         # (3*tb, C)
    tgt = target_ref[...]                                # (3*tb, 1) int32, 0-indexed
    rows, ncls = logits.shape

    col = lax.broadcasted_iota(jnp.int32, (rows, ncls), 1)
    onehot = (col == tgt).astype(jnp.float32)

    row_max = jnp.max(logits, axis=1, keepdims=True)
    shifted = logits - row_max
    lse = jnp.log(jnp.sum(jnp.exp(shifted), axis=1, keepdims=True)) + row_max
    correct = jnp.sum(logits * onehot, axis=1, keepdims=True)
    ce_rows = lse - correct                              # (3*tb, 1)

    pred_row = tile * rows + lax.broadcasted_iota(jnp.int32, (rows, 1), 0)
    ce_rows = jnp.where(pred_row < valid_pred_rows, ce_rows, 0.0)
    ce_sum = jnp.sum(ce_rows)

    acc_ref[0] = acc_ref[0] + trip_sum
    acc_ref[1] = acc_ref[1] + ce_sum

    @pl.when(k == nk - 1)
    def _finalize():
        trip_ref[...] = jnp.broadcast_to(acc_ref[0], trip_ref.shape)
        ce_ref[...] = jnp.broadcast_to(acc_ref[1], ce_ref.shape)


def online_reciprocal_softmax_loss(anchor_embed, pos_embed, neg_embed,
                                   preds, labels, labels_neg,
                                   lambda_factor=0.0,
                                   *, row_tile=512, num_splits=2):
    """Pallas implementation of OnlineReciprocalSoftmaxLoss.forward.

    anchor/pos/neg_embed: (B, D) float; preds: (3B, C) float;
    labels, labels_neg: (B,) int (1-indexed class ids).
    Returns (loss_total, triplet_losses.mean(), loss_softmax) as f32 scalars.
    """
    anchor_embed = jnp.asarray(anchor_embed)
    pos_embed = jnp.asarray(pos_embed)
    neg_embed = jnp.asarray(neg_embed)
    preds = jnp.asarray(preds)

    B, D = anchor_embed.shape
    N, C = preds.shape
    if N != 3 * B:
        raise ValueError("preds must have 3 * batch rows")

    labels = jnp.asarray(labels).reshape(-1).astype(jnp.int32)
    labels_neg = jnp.asarray(labels_neg).reshape(-1).astype(jnp.int32)
    # Fold the 1-indexed label correction into the wrapper.
    target = jnp.concatenate([labels, labels, labels_neg], axis=0) - 1   # (3B,)

    # ---- Tile sizing: double-buffered footprint must fit scoped VMEM ----
    d_pad = _round_up(D, 128)
    c_pad = _round_up(C, 128)
    itemsize = max(anchor_embed.dtype.itemsize, preds.dtype.itemsize, 4)

    def tile_footprint(t):
        per_buf = 3 * t * d_pad * itemsize      # anchor / pos / neg blocks
        per_buf += 3 * t * c_pad * itemsize     # preds block (3*t rows)
        per_buf += 3 * t * 128 * 4              # int32 target column (lane padded)
        return 2 * per_buf                      # x2 double buffering

    vmem_budget = 20 * 1024 * 1024              # conservative for v7x's 64 MiB VMEM
    tb = min(_round_up(B, 8), _round_up(max(int(row_tile), 8), 8))
    while tb > 8 and tile_footprint(tb) > vmem_budget:
        tb = max(8, _round_up(tb // 2, 8))

    num_tiles = _cdiv(B, tb)
    splits = max(1, min(int(num_splits), num_tiles))
    num_tiles = _round_up(num_tiles, splits)
    tiles_per_split = num_tiles // splits
    b_pad = num_tiles * tb

    def pad_rows(x, rows, value=0):
        extra = rows - x.shape[0]
        if extra == 0:
            return x
        cfg = ((0, extra),) + ((0, 0),) * (x.ndim - 1)
        return jnp.pad(x, cfg, constant_values=value)

    anchor_p = pad_rows(anchor_embed, b_pad)
    pos_p = pad_rows(pos_embed, b_pad)
    neg_p = pad_rows(neg_embed, b_pad)
    preds_p = pad_rows(preds, 3 * b_pad)
    target_p = pad_rows(target, 3 * b_pad, value=-1)[:, None]    # (3*b_pad, 1)

    def row_map(c, k):
        return (c * tiles_per_split + k, 0)

    emb_spec = pl.BlockSpec((tb, D), row_map)
    preds_spec = pl.BlockSpec((3 * tb, C), row_map)
    target_spec = pl.BlockSpec((3 * tb, 1), row_map)
    out_spec = pl.BlockSpec((1, 8, 128), lambda c, k: (c, 0, 0))

    kernel = functools.partial(_loss_kernel, B, 3 * B)

    vmem_limit = int(min(100 * 1024 * 1024,
                         max(32 * 1024 * 1024, 2 * tile_footprint(tb))))

    trip_part, ce_part = pl.pallas_call(
        kernel,
        out_shape=(jax.ShapeDtypeStruct((splits, 8, 128), jnp.float32),
                   jax.ShapeDtypeStruct((splits, 8, 128), jnp.float32)),
        grid=(splits, tiles_per_split),
        in_specs=[emb_spec, emb_spec, emb_spec, preds_spec, target_spec],
        out_specs=(out_spec, out_spec),
        scratch_shapes=[pltpu.SMEM((2,), jnp.float32)],
        compiler_params=pltpu.CompilerParams(
            dimension_semantics=("parallel", "arbitrary"),
            vmem_limit_bytes=vmem_limit),
    )(anchor_p, pos_p, neg_p, preds_p, target_p)

    trip_mean = jnp.sum(trip_part[:, 0, 0]) / jnp.float32(B)
    loss_softmax = jnp.sum(ce_part[:, 0, 0]) / jnp.float32(3 * B)
    loss_total = jnp.asarray(lambda_factor, jnp.float32) * trip_mean + loss_softmax
    return loss_total, trip_mean, loss_softmax


def _reference(anchor, pos, neg, preds, labels, labels_neg, lambda_factor):
    labels = labels.reshape(-1).astype(jnp.int32)
    labels_neg = labels_neg.reshape(-1).astype(jnp.int32)
    target = jnp.concatenate([labels, labels, labels_neg], axis=0) - 1
    ap = jnp.sum((anchor - pos) ** 2, axis=1)
    an = jnp.sum((anchor - neg) ** 2, axis=1)
    trip = ap + 1.0 / an
    trip_mean = jnp.mean(trip)
    logp = jax.nn.log_softmax(preds.astype(jnp.float32), axis=1)
    ce = -jnp.mean(jnp.take_along_axis(logp, target[:, None], axis=1))
    return lambda_factor * trip_mean + ce, trip_mean, ce


if __name__ == "__main__":
    # ---- Case 1: small, aligned shapes ----
    B, D, C = 8, 32, 5
    lambda_factor = 0.5

    key = jax.random.PRNGKey(0)
    k1, k2, k3, k4, k5, k6 = jax.random.split(key, 6)
    anchor = jax.random.normal(k1, (B, D), dtype=jnp.float32)
    pos = jax.random.normal(k2, (B, D), dtype=jnp.float32)
    neg = jax.random.normal(k3, (B, D), dtype=jnp.float32)
    preds = jax.random.normal(k4, (3 * B, C), dtype=jnp.float32)
    labels = jax.random.randint(k5, (B,), 1, C + 1, dtype=jnp.int32)      # 1-indexed
    labels_neg = jax.random.randint(k6, (B,), 1, C + 1, dtype=jnp.int32)  # 1-indexed

    out = online_reciprocal_softmax_loss(anchor, pos, neg, preds, labels,
                                         labels_neg, lambda_factor)
    out = jax.block_until_ready(out)
    ref = _reference(anchor, pos, neg, preds, labels, labels_neg, lambda_factor)
    for got, want in zip(out, ref):
        np.testing.assert_allclose(np.asarray(got), np.asarray(want),
                                   rtol=1e-5, atol=1e-5)

    # ---- Case 2: ragged batch, exercises padding/masking and the 2-way split ----
    B2, D2, C2 = 10, 40, 7
    j1, j2, j3, j4, j5, j6 = jax.random.split(jax.random.PRNGKey(1), 6)
    anchor2 = jax.random.normal(j1, (B2, D2), dtype=jnp.float32)
    pos2 = jax.random.normal(j2, (B2, D2), dtype=jnp.float32)
    neg2 = jax.random.normal(j3, (B2, D2), dtype=jnp.float32)
    preds2 = jax.random.normal(j4, (3 * B2, C2), dtype=jnp.float32)
    labels2 = jax.random.randint(j5, (B2,), 1, C2 + 1, dtype=jnp.int32)
    labels_neg2 = jax.random.randint(j6, (B2,), 1, C2 + 1, dtype=jnp.int32)

    out2 = online_reciprocal_softmax_loss(anchor2, pos2, neg2, preds2, labels2,
                                          labels_neg2, 0.25,
                                          row_tile=8, num_splits=2)
    out2 = jax.block_until_ready(out2)
    ref2 = _reference(anchor2, pos2, neg2, preds2, labels2, labels_neg2, 0.25)
    for got, want in zip(out2, ref2):
        np.testing.assert_allclose(np.asarray(got), np.asarray(want),
                                   rtol=1e-5, atol=1e-5)

    print("KERNEL_OK")
</pallas_src>

<mosaic_0001>
module attributes {stable_mosaic.version = 11 : i64} {
  func.func @_loss_kernel(%arg0: i32, %arg1: i32, %arg2: memref<8x32xf32, #tpu.memory_space<vmem>>, %arg3: memref<8x32xf32, #tpu.memory_space<vmem>>, %arg4: memref<8x32xf32, #tpu.memory_space<vmem>>, %arg5: memref<24x5xf32, #tpu.memory_space<vmem>>, %arg6: memref<24x1xi32, #tpu.memory_space<vmem>>, %arg7: memref<1x8x128xf32, #tpu.memory_space<vmem>>, %arg8: memref<1x8x128xf32, #tpu.memory_space<vmem>>, %arg9: memref<2xf32, #tpu.memory_space<smem>>) attributes {dimension_semantics = [#tpu.dimension_semantics<parallel>, #tpu.dimension_semantics<arbitrary>], iteration_bounds = array<i64: 1, 1>, scalar_prefetch = 0 : i64, scratch_operands = 1 : i64, tpu.core_type = #tpu.core_type<tc>, window_params = [{transform_indices = @transform_0, window_bounds = array<i64: 8, 32>}, {transform_indices = @transform_1, window_bounds = array<i64: 8, 32>}, {transform_indices = @transform_2, window_bounds = array<i64: 8, 32>}, {transform_indices = @transform_3, window_bounds = array<i64: 24, 5>}, {transform_indices = @transform_4, window_bounds = array<i64: 24, 1>}, {transform_indices = @transform_5, window_bounds = array<i64: 1, 8, 128>}, {transform_indices = @transform_6, window_bounds = array<i64: 1, 8, 128>}]} {
    %c1_i32 = arith.constant 1 : i32
    %0 = arith.muli %arg0, %c1_i32 : i32
    %1 = arith.addi %0, %arg1 : i32
    %c0_i32 = arith.constant 0 : i32
    %2 = arith.cmpi eq, %arg1, %c0_i32 : i32
    %3 = arith.extui %2 : i1 to i32
    %c0_i32_0 = arith.constant 0 : i32
    %4 = arith.cmpi ne, %3, %c0_i32_0 : i32
    scf.if %4 {
      %cst_26 = arith.constant 0.000000e+00 : f32
      %c0_27 = arith.constant 0 : index
      %72 = memref.load %arg9[%c0_27] : memref<2xf32, #tpu.memory_space<smem>>
      memref.store %cst_26, %arg9[%c0_27] : memref<2xf32, #tpu.memory_space<smem>>
      %cst_28 = arith.constant 0.000000e+00 : f32
      %c1_29 = arith.constant 1 : index
      %73 = memref.load %arg9[%c1_29] : memref<2xf32, #tpu.memory_space<smem>>
      memref.store %cst_28, %arg9[%c1_29] : memref<2xf32, #tpu.memory_space<smem>>
    } else {
    }
    %c0 = arith.constant 0 : index
    %c0_1 = arith.constant 0 : index
    %5 = vector.load %arg2[%c0, %c0_1] : memref<8x32xf32, #tpu.memory_space<vmem>>, vector<8x32xf32>
    %c0_2 = arith.constant 0 : index
    %c0_3 = arith.constant 0 : index
    %6 = vector.load %arg3[%c0_2, %c0_3] : memref<8x32xf32, #tpu.memory_space<vmem>>, vector<8x32xf32>
    %c0_4 = arith.constant 0 : index
    %c0_5 = arith.constant 0 : index
    %7 = vector.load %arg4[%c0_4, %c0_5] : memref<8x32xf32, #tpu.memory_space<vmem>>, vector<8x32xf32>
    %8 = arith.subf %5, %6 : vector<8x32xf32>
    %9 = arith.subf %5, %7 : vector<8x32xf32>
    %10 = arith.mulf %8, %8 : vector<8x32xf32>
    %cst = arith.constant dense<0.000000e+00> : vector<8xf32>
    %11 = vector.multi_reduction <add>, %10, %cst [1] : vector<8x32xf32> to vector<8xf32>
    %12 = vector.shape_cast %11 : vector<8xf32> to vector<8x1xf32>
    %13 = arith.mulf %9, %9 : vector<8x32xf32>
    %cst_6 = arith.constant dense<0.000000e+00> : vector<8xf32>
    %14 = vector.multi_reduction <add>, %13, %cst_6 [1] : vector<8x32xf32> to vector<8xf32>
    %15 = vector.shape_cast %14 : vector<8xf32> to vector<8x1xf32>
    %cst_7 = arith.constant 1.000000e+00 : f32
    %16 = vector.broadcast %cst_7 : f32 to vector<8x1xf32>
    %17 = arith.divf %16, %15 : vector<8x1xf32>
    %18 = arith.addf %12, %17 : vector<8x1xf32>
    %c8_i32 = arith.constant 8 : i32
    %19 = arith.muli %1, %c8_i32 : i32
    %20 = tpu.iota {dimensions = array<i32: 0>} : vector<8x1xi32>
    %21 = vector.broadcast %19 : i32 to vector<8x1xi32>
    %22 = arith.addi %21, %20 : vector<8x1xi32>
    %c8_i32_8 = arith.constant 8 : i32
    %23 = vector.broadcast %c8_i32_8 : i32 to vector<8x1xi32>
    %24 = arith.cmpi slt, %22, %23 : vector<8x1xi32>
    %cst_9 = arith.constant 0.000000e+00 : f32
    %25 = vector.broadcast %cst_9 : f32 to vector<8x1xf32>
    %26 = arith.select %24, %18, %25 : vector<8x1xi1>, vector<8x1xf32>
    %27 = vector.shape_cast %26 : vector<8x1xf32> to vector<1x8x1xf32>
    %cst_10 = arith.constant dense<0.000000e+00> : vector<1xf32>
    %28 = vector.multi_reduction <add>, %27, %cst_10 [1, 2] : vector<1x8x1xf32> to vector<1xf32>
    %29 = vector.shape_cast %28 : vector<1xf32> to vector<1x1x1xf32>
    %30 = vector.extract %29[0, 0, 0] : f32 from vector<1x1x1xf32>
    %c0_11 = arith.constant 0 : index
    %c0_12 = arith.constant 0 : index
    %31 = vector.load %arg5[%c0_11, %c0_12] : memref<24x5xf32, #tpu.memory_space<vmem>>, vector<24x5xf32>
    %c0_13 = arith.constant 0 : index
    %c0_14 = arith.constant 0 : index
    %32 = vector.load %arg6[%c0_13, %c0_14] : memref<24x1xi32, #tpu.memory_space<vmem>>, vector<24x1xi32>
    %33 = tpu.iota {dimensions = array<i32: 1>} : vector<24x5xi32>
    %34 = vector.broadcast %32 : vector<24x1xi32> to vector<24x5xi32>
    %35 = arith.cmpi eq, %33, %34 : vector<24x5xi32>
    %36 = arith.extui %35 : vector<24x5xi1> to vector<24x5xi32>
    %37 = arith.sitofp %36 : vector<24x5xi32> to vector<24x5xf32>
    %cst_15 = arith.constant dense<0xFF800000> : vector<24xf32>
    %38 = vector.multi_reduction <maximumf>, %31, %cst_15 [1] : vector<24x5xf32> to vector<24xf32>
    %39 = vector.shape_cast %38 : vector<24xf32> to vector<24x1xf32>
    %40 = vector.broadcast %39 : vector<24x1xf32> to vector<24x5xf32>
    %41 = arith.subf %31, %40 : vector<24x5xf32>
    %42 = math.exp %41 : vector<24x5xf32>
    %cst_16 = arith.constant dense<0.000000e+00> : vector<24xf32>
    %43 = vector.multi_reduction <add>, %42, %cst_16 [1] : vector<24x5xf32> to vector<24xf32>
    %44 = vector.shape_cast %43 : vector<24xf32> to vector<24x1xf32>
    %45 = math.log %44 : vector<24x1xf32>
    %46 = arith.addf %45, %39 : vector<24x1xf32>
    %47 = arith.mulf %31, %37 : vector<24x5xf32>
    %cst_17 = arith.constant dense<0.000000e+00> : vector<24xf32>
    %48 = vector.multi_reduction <add>, %47, %cst_17 [1] : vector<24x5xf32> to vector<24xf32>
    %49 = vector.shape_cast %48 : vector<24xf32> to vector<24x1xf32>
    %50 = arith.subf %46, %49 : vector<24x1xf32>
    %c24_i32 = arith.constant 24 : i32
    %51 = arith.muli %1, %c24_i32 : i32
    %52 = tpu.iota {dimensions = array<i32: 0>} : vector<24x1xi32>
    %53 = vector.broadcast %51 : i32 to vector<24x1xi32>
    %54 = arith.addi %53, %52 : vector<24x1xi32>
    %c24_i32_18 = arith.constant 24 : i32
    %55 = vector.broadcast %c24_i32_18 : i32 to vector<24x1xi32>
    %56 = arith.cmpi slt, %54, %55 : vector<24x1xi32>
    %cst_19 = arith.constant 0.000000e+00 : f32
    %57 = vector.broadcast %cst_19 : f32 to vector<24x1xf32>
    %58 = arith.select %56, %50, %57 : vector<24x1xi1>, vector<24x1xf32>
    %59 = vector.shape_cast %58 : vector<24x1xf32> to vector<1x24x1xf32>
    %cst_20 = arith.constant dense<0.000000e+00> : vector<1xf32>
    %60 = vector.multi_reduction <add>, %59, %cst_20 [1, 2] : vector<1x24x1xf32> to vector<1xf32>
    %61 = vector.shape_cast %60 : vector<1xf32> to vector<1x1x1xf32>
    %62 = vector.extract %61[0, 0, 0] : f32 from vector<1x1x1xf32>
    %c0_21 = arith.constant 0 : index
    %63 = memref.load %arg9[%c0_21] : memref<2xf32, #tpu.memory_space<smem>>
    %64 = arith.addf %63, %30 : f32
    %c0_22 = arith.constant 0 : index
    %65 = memref.load %arg9[%c0_22] : memref<2xf32, #tpu.memory_space<smem>>
    memref.store %64, %arg9[%c0_22] : memref<2xf32, #tpu.memory_space<smem>>
    %c1 = arith.constant 1 : index
    %66 = memref.load %arg9[%c1] : memref<2xf32, #tpu.memory_space<smem>>
    %67 = arith.addf %66, %62 : f32
    %c1_23 = arith.constant 1 : index
    %68 = memref.load %arg9[%c1_23] : memref<2xf32, #tpu.memory_space<smem>>
    memref.store %67, %arg9[%c1_23] : memref<2xf32, #tpu.memory_space<smem>>
    %c0_i32_24 = arith.constant 0 : i32
    %69 = arith.cmpi eq, %arg1, %c0_i32_24 : i32
    %70 = arith.extui %69 : i1 to i32
    %c0_i32_25 = arith.constant 0 : i32
    %71 = arith.cmpi ne, %70, %c0_i32_25 : i32
    scf.if %71 {
      %c0_26 = arith.constant 0 : index
      %72 = memref.load %arg9[%c0_26] : memref<2xf32, #tpu.memory_space<smem>>
      %73 = vector.broadcast %72 : f32 to vector<1x8x128xf32>
      %c0_27 = arith.constant 0 : index
      %c0_28 = arith.constant 0 : index
      %c0_29 = arith.constant 0 : index
      %74 = vector.load %arg7[%c0_27, %c0_28, %c0_29] : memref<1x8x128xf32, #tpu.memory_space<vmem>>, vector<1x8x128xf32>
      tpu.vector_store %arg7[%c0_27, %c0_28, %c0_29], %73 {strides = array<i32>} : memref<1x8x128xf32, #tpu.memory_space<vmem>>, vector<1x8x128xf32>,
      %c1_30 = arith.constant 1 : index
      %75 = memref.load %arg9[%c1_30] : memref<2xf32, #tpu.memory_space<smem>>
      %76 = vector.broadcast %75 : f32 to vector<1x8x128xf32>
      %c0_31 = arith.constant 0 : index
      %c0_32 = arith.constant 0 : index
      %c0_33 = arith.constant 0 : index
      %77 = vector.load %arg8[%c0_31, %c0_32, %c0_33] : memref<1x8x128xf32, #tpu.memory_space<vmem>>, vector<1x8x128xf32>
      tpu.vector_store %arg8[%c0_31, %c0_32, %c0_33], %76 {strides = array<i32>} : memref<1x8x128xf32, #tpu.memory_space<vmem>>, vector<1x8x128xf32>,
    } else {
    }
    return
  }
  func.func @transform_0(%arg0: i32, %arg1: i32) -> (i32, i32) {
    %c1_i32 = arith.constant 1 : i32
    %0 = arith.muli %arg0, %c1_i32 : i32
    %1 = arith.addi %0, %arg1 : i32
    %c0_i32 = arith.constant 0 : i32
    %c0_i32_0 = arith.constant 0 : i32
    return %1, %c0_i32 : i32, i32
  }
  func.func @transform_1(%arg0: i32, %arg1: i32) -> (i32, i32) {
    %c1_i32 = arith.constant 1 : i32
    %0 = arith.muli %arg0, %c1_i32 : i32
    %1 = arith.addi %0, %arg1 : i32
    %c0_i32 = arith.constant 0 : i32
    %c0_i32_0 = arith.constant 0 : i32
    return %1, %c0_i32 : i32, i32
  }
  func.func @transform_2(%arg0: i32, %arg1: i32) -> (i32, i32) {
    %c1_i32 = arith.constant 1 : i32
    %0 = arith.muli %arg0, %c1_i32 : i32
    %1 = arith.addi %0, %arg1 : i32
    %c0_i32 = arith.constant 0 : i32
    %c0_i32_0 = arith.constant 0 : i32
    return %1, %c0_i32 : i32, i32
  }
  func.func @transform_3(%arg0: i32, %arg1: i32) -> (i32, i32) {
    %c1_i32 = arith.constant 1 : i32
    %0 = arith.muli %arg0, %c1_i32 : i32
    %1 = arith.addi %0, %arg1 : i32
    %c0_i32 = arith.constant 0 : i32
    %c0_i32_0 = arith.constant 0 : i32
    return %1, %c0_i32 : i32, i32
  }
  func.func @transform_4(%arg0: i32, %arg1: i32) -> (i32, i32) {
    %c1_i32 = arith.constant 1 : i32
    %0 = arith.muli %arg0, %c1_i32 : i32
    %1 = arith.addi %0, %arg1 : i32
    %c0_i32 = arith.constant 0 : i32
    %c0_i32_0 = arith.constant 0 : i32
    return %1, %c0_i32 : i32, i32
  }
  func.func @transform_5(%arg0: i32, %arg1: i32) -> (i32, i32, i32) {
    %c0_i32 = arith.constant 0 : i32
    %c0_i32_0 = arith.constant 0 : i32
    %c0_i32_1 = arith.constant 0 : i32
    return %arg0, %c0_i32, %c0_i32_0 : i32, i32, i32
  }
  func.func @transform_6(%arg0: i32, %arg1: i32) -> (i32, i32, i32) {
    %c0_i32 = arith.constant 0 : i32
    %c0_i32_0 = arith.constant 0 : i32
    %c0_i32_1 = arith.constant 0 : i32
    return %arg0, %c0_i32, %c0_i32_0 : i32, i32, i32
  }
}

</mosaic_0001>

<llo_original>
// kernel: tpu_custom_call.1
$region0: #{tpu_custom_call.1}
  #allocation0 [shape = 'u32[]', space=smem, size = 0x4, offset = 0x4, fixed_abs, tag = 'smem constant byte address 0x4 - core index']
  #allocation1 [shape = 'u32[144,128]{1,0:T(1,128)}', space=vmem, size = 0x12000, scoped, tag = 'internal scratch']
  #allocation2 [shape = 'f32[2]{0:T(128)}', space=smem, size = 0x200, scoped, tag = 'scratch operand']
  %s0 = inlined_call_operand.vmem [shape: f32[8,32], index: 0, kind: input, shape index: {}]
  %s1 = inlined_call_operand.vmem [shape: f32[8,32], index: 1, kind: input, shape index: {}]
  %s2 = inlined_call_operand.vmem [shape: f32[8,32], index: 2, kind: input, shape index: {}]
  %s3 = inlined_call_operand.vmem [shape: f32[24,5], index: 3, kind: input, shape index: {}]
  %s4 = inlined_call_operand.vmem [shape: s32[24,1], index: 4, kind: input, shape index: {}]
  %s5 = inlined_call_operand.hbm [shape: f32[1,8,128], index: 5, kind: output, shape index: {0}]
  %s6 = inlined_call_operand.hbm [shape: f32[1,8,128], index: 6, kind: output, shape index: {1}]
  %7 = xla_tuple %s5, %s6
  %s8 = sld [smem:[#allocation0]]
  $region46: #{tpu_custom_call.1} parent=0
    _
  %s10 = ssub.s32 1, %s8
  %s11 = scalar_select 0, %s10, %s8
  $region1: #{tpu_custom_call.1} parent=0
    #allocation3 [shape = 'u8[4096]{0}', space=vmem, size = 0x1000, scoped, tag = 'output window, operand 0, single buffered']
    #allocation4 [shape = 's32[1]{0}', space=sflag, size = 0x4, scoped, tag = 'scoped memory for tpu_custom_call.1']
    #allocation5 [shape = 'u8[4096]{0}', space=vmem, size = 0x1000, scoped, tag = 'output window, operand 1, single buffered']
    #allocation6 [shape = 's32[1]{0}', space=sflag, size = 0x4, scoped, tag = 'scoped memory for tpu_custom_call.1']
    %12 = vsyncpa [#allocation4], 0
    %13 = vsyncpa [#allocation6], 0
    // Predicated region
    $region2: #{tpu_custom_call.1} parent=1 // pred_check
      _
    $region3: #{tpu_custom_call.1} parent=1 // pred_check_branch
      %15 = sbr.rel (0) target = $region5
    $region4: #{tpu_custom_call.1} parent=1 // pred_region
      %s16 = sadd.s32 0, 0
      %p17 = scmp.lt.s32.totalorder %s16, 0
      %s18 = scalar_select %p17, %s16, 0
      %s19 = smul.addr %s18, 8
      %s20 = scalar_lea.vmem %s0, %s19
      %s21 = sadd.s32 0, 0
    $region5: #{tpu_custom_call.1} parent=1 // pred_fallthru
      _
    // Predicated region
    $region6: #{tpu_custom_call.1} parent=1 // pred_check
      _
    $region7: #{tpu_custom_call.1} parent=1 // pred_check_branch
      %23 = sbr.rel (0) target = $region9
    $region8: #{tpu_custom_call.1} parent=1 // pred_region
      %s24 = sadd.s32 0, 0
      %p25 = scmp.lt.s32.totalorder %s24, 0
      %s26 = scalar_select %p25, %s24, 0
      %s27 = smul.addr %s26, 8
      %s28 = scalar_lea.vmem %s1, %s27
      %s29 = sadd.s32 0, 0
    $region9: #{tpu_custom_call.1} parent=1 // pred_fallthru
      _
    // Predicated region
    $region10: #{tpu_custom_call.1} parent=1 // pred_check
      _
    $region11: #{tpu_custom_call.1} parent=1 // pred_check_branch
      %31 = sbr.rel (0) target = $region13
    $region12: #{tpu_custom_call.1} parent=1 // pred_region
      %s32 = sadd.s32 0, 0
      %p33 = scmp.lt.s32.totalorder %s32, 0
      %s34 = scalar_select %p33, %s32, 0
      %s35 = smul.addr %s34, 8
      %s36 = scalar_lea.vmem %s2, %s35
      %s37 = sadd.s32 0, 0
    $region13: #{tpu_custom_call.1} parent=1 // pred_fallthru
      _
    // Predicated region
    $region14: #{tpu_custom_call.1} parent=1 // pred_check
      _
    $region15: #{tpu_custom_call.1} parent=1 // pred_check_branch
      %39 = sbr.rel (0) target = $region17
    $region16: #{tpu_custom_call.1} parent=1 // pred_region
      %s40 = sadd.s32 0, 0
      %s41 = smul.u32 3, %s40
      %p42 = scmp.lt.s32.totalorder %s41, 2
      %s43 = scalar_select %p42, %s41, 2
      %s44 = smul.addr %s43, 8
      %s45 = scalar_lea.vmem %s3, %s44
      %s46 = sadd.s32 0, 0
      %s47 = smul.u32 3, %s46
    $region17: #{tpu_custom_call.1} parent=1 // pred_fallthru
      _
    // Predicated region
    $region18: #{tpu_custom_call.1} parent=1 // pred_check
      _
    $region19: #{tpu_custom_call.1} parent=1 // pred_check_branch
      %49 = sbr.rel (0) target = $region21
    $region20: #{tpu_custom_call.1} parent=1 // pred_region
      %s50 = sadd.s32 0, 0
      %s51 = smul.u32 3, %s50
      %p52 = scmp.lt.s32.totalorder %s51, 2
      %s53 = scalar_select %p52, %s51, 2
      %s54 = smul.addr %s53, 8
      %s55 = scalar_lea.vmem %s4, %s54
      %s56 = sadd.s32 0, 0
      %s57 = smul.u32 3, %s56
    $region21: #{tpu_custom_call.1} parent=1 // pred_fallthru
      _
    %s58 = sadd.s32 0, 0
    %p59 = scmp.lt.s32.totalorder %s58, 0
    %s60 = scalar_select %p59, %s58, 0
    %s61 = smul.addr %s60, 8
    %s62 = scalar_lea.vmem %s0, %s61
    %s63 = sadd.s32 0, 0
    %p64 = scmp.lt.s32.totalorder %s63, 0
    %s65 = scalar_select %p64, %s63, 0
    %s66 = smul.addr %s65, 8
    %s67 = scalar_lea.vmem %s1, %s66
    %s68 = sadd.s32 0, 0
    %p69 = scmp.lt.s32.totalorder %s68, 0
    %s70 = scalar_select %p69, %s68, 0
    %s71 = smul.addr %s70, 8
    %s72 = scalar_lea.vmem %s2, %s71
    %s73 = sadd.s32 0, 0
    %s74 = smul.u32 3, %s73
    %p75 = scmp.lt.s32.totalorder %s74, 2
    %s76 = scalar_select %p75, %s74, 2
    %s77 = smul.addr %s76, 8
    %s78 = scalar_lea.vmem %s3, %s77
    %s79 = sadd.s32 0, 0
    %s80 = smul.u32 3, %s79
    %p81 = scmp.lt.s32.totalorder %s80, 2
    %s82 = scalar_select %p81, %s80, 2
    %s83 = smul.addr %s82, 8
    %s84 = scalar_lea.vmem %s4, %s83
    %s85 = sadd.s32 0, 0
    %p86 = scmp.lt.s32.totalorder %s85, 0
    %s87 = scalar_select %p86, %s85, 0
    %s88 = smul.addr %s87, 8
    %s89 = scalar_lea.vmem %s0, %s88
    %s90 = sadd.s32 0, 0
    %s91 = sadd.s32 0, 0
    %p92 = scmp.lt.s32.totalorder %s91, 0
    %s93 = scalar_select %p92, %s91, 0
    %s94 = smul.addr %s93, 8
    %s95 = scalar_lea.vmem %s1, %s94
    %s96 = sadd.s32 0, 0
    %s97 = sadd.s32 0, 0
    %p98 = scmp.lt.s32.totalorder %s97, 0
    %s99 = scalar_select %p98, %s97, 0
    %s100 = smul.addr %s99, 8
    %s101 = scalar_lea.vmem %s2, %s100
    %s102 = sadd.s32 0, 0
    %s103 = sadd.s32 0, 0
    %s104 = smul.u32 3, %s103
    %p105 = scmp.lt.s32.totalorder %s104, 2
    %s106 = scalar_select %p105, %s104, 2
    %s107 = smul.addr %s106, 8
    %s108 = scalar_lea.vmem %s3, %s107
    %s109 = sadd.s32 0, 0
    %s110 = smul.u32 3, %s109
    %s111 = sadd.s32 0, 0
    %s112 = smul.u32 3, %s111
    %p113 = scmp.lt.s32.totalorder %s112, 2
    %s114 = scalar_select %p113, %s112, 2
    %s115 = smul.addr %s114, 8
    %s116 = scalar_lea.vmem %s4, %s115
    %s117 = sadd.s32 0, 0
    %s118 = smul.u32 3, %s117
    %s119 = sadd.s32 0, 0
    %p120 = scmp.eq.s32.totalorder 0, 0
    // Predicated region
    $region22: #{tpu_custom_call.1} parent=1 // pred_check
      %p121 = pneg %p120
    $region23: #{tpu_custom_call.1} parent=1 // pred_check_branch
      %123 = sbr.rel (%p121) target = $region25
    $region24: #{tpu_custom_call.1} parent=1 // pred_region
      %s124 = scalar_lea.smem [#allocation2], 0
      %125 = sst [smem:[%s124]] 0.0
      %s126 = scalar_lea.smem [#allocation2], 1
      %127 = sst [smem:[%s126]] 0.0
    $region25: #{tpu_custom_call.1} parent=1 // pred_fallthru
      _
    %v128 = vld [vmem:[%s89] sm:$0xff]
    %v129 = vld [vmem:[%s95] sm:$0xff]
    %v130 = vld [vmem:[%s101] sm:$0xff]
    %v131 = vsub.f32 %v128, %v129
    %v132 = vsub.f32 %v128, %v130
    %v133 = vmul.f32 %v131, %v131
    %vm134 = vcmask 261120
    %v135 = vsel %vm134, %v133, 0.0
    %136 = vadd.xlane.f32.xlu0 %v135
    %v137 = vpop.xlane.xlu0 %136
    %v138 = vmul.f32 %v132, %v132
    %v139 = vsel %vm134, %v138, 0.0
    %140 = vadd.xlane.f32.xlu0 %v139
    %v141 = vpop.xlane.xlu0 %140
    %v142 = vrcp.pop %v141
    %v143 = vmul.f32 1.0, %v142
    %v144 = vadd.f32 %v137, %v143
    %s145 = smul.u32 %s119, 8
    %v146 = vlaneseq
    %v147 = vshrl.u32 %v146, 7
    %v148 = vstv %s145
    %v149 = vadd.s32 %v148, %v147
    %vm150 = vcmp.lt.s32.totalorder %v149, 8
    %v151 = vsel %vm150, %v144, 0.0
    %vm152 = vcmask 7168
    %v153 = vsel %vm152, %v151, 0.0
    %154 = vadd.xlane.f32.xlu0 %v153
    %v155 = vpop.xlane.xlu0 %154
    %v156 = vrot.slane %v155, 4
    %v157 = vadd.f32 %v155, %v156
    %v158 = vrot.slane %v157, 2
    %v159 = vadd.f32 %v157, %v158
    %v160 = vrot.slane %v159, 1
    %v161 = vadd.f32 %v159, %v160
    %s162 = vtos %v161
    %v163 = vld [vmem:[%s108] sm:$0xff]
    %v164 = vld [vmem:[%s108 + $0x8] sm:$0xff]
    %v165 = vld [vmem:[%s108 + $0x10] sm:$0xff]
    %v166 = vld [vmem:[%s116] sm:$0xff]
    %v167 = vld [vmem:[%s116 + $0x8] sm:$0xff]
    %v168 = vld [vmem:[%s116 + $0x10] sm:$0xff]
    %v169 = vlaneseq
    %v170 = vand.u32 %v169, 127
    %171 = vset.pattern.permute.xlu0 0
    %172 = vperm.xlu0 %171, %v166
    %v173 = vpop.permute.xlu0 %172
    %174 = vset.pattern.permute.xlu0 0
    %175 = vperm.xlu0 %174, %v167
    %v176 = vpop.permute.xlu0 %175
    %177 = vset.pattern.permute.xlu0 0
    %178 = vperm.xlu0 %177, %v168
    %v179 = vpop.permute.xlu0 %178
    %vm180 = vcmp.eq.s32.totalorder %v170, %v173
    %vm181 = vcmp.eq.s32.totalorder %v170, %v176
    %vm182 = vcmp.eq.s32.totalorder %v170, %v179
    %v183 = vsel %vm180, 1, 0
    %v184 = vsel %vm181, 1, 0
    %v185 = vsel %vm182, 1, 0
    %v186 = vcvt.s32.f32 %v183
    %v187 = vcvt.s32.f32 %v184
    %v188 = vcvt.s32.f32 %v185
    %vm189 = vcmask 39936
    %v190 = vsel %vm189, %v163, -inf
    %191 = vmax.xlane.f32.xlu0 %v190
    %v192 = vpop.xlane.xlu0 %191
    %v193 = vsel %vm189, %v164, -inf
    %194 = vmax.xlane.f32.xlu0 %v193
    %v195 = vpop.xlane.xlu0 %194
    %v196 = vsel %vm189, %v165, -inf
    %197 = vmax.xlane.f32.xlu0 %v196
    %v198 = vpop.xlane.xlu0 %197
    %v199 = vsub.f32 %v163, %v192
    %v200 = vsub.f32 %v164, %v195
    %v201 = vsub.f32 %v165, %v198
    %v202 = vmul.f32 %v199, 1.442695
    %v203 = vpow.pop %v202
    %v204 = vmul.f32 %v200, 1.442695
    %v205 = vpow.pop %v204
    %v206 = vmul.f32 %v201, 1.442695
    %v207 = vpow.pop %v206
    %v208 = vsel %vm189, %v203, 0.0
    %209 = vadd.xlane.f32.xlu0 %v208
    %v210 = vpop.xlane.xlu0 %209
    %v211 = vsel %vm189, %v205, 0.0
    %212 = vadd.xlane.f32.xlu0 %v211
    %v213 = vpop.xlane.xlu0 %212
    %v214 = vsel %vm189, %v207, 0.0
    %215 = vadd.xlane.f32.xlu0 %v214
    %v216 = vpop.xlane.xlu0 %215
    %v217 = vlog2.pop %v210
    %v218 = vmul.f32 %v217, 0.6931472
    %v219 = vlog2.pop %v213
    %v220 = vmul.f32 %v219, 0.6931472
    %v221 = vlog2.pop %v216
    %v222 = vmul.f32 %v221, 0.6931472
    %v223 = vadd.f32 %v218, %v192
    %v224 = vadd.f32 %v220, %v195
    %v225 = vadd.f32 %v222, %v198
    %v226 = vmul.f32 %v163, %v186
    %v227 = vmul.f32 %v164, %v187
    %v228 = vmul.f32 %v165, %v188
    %v229 = vsel %vm189, %v226, 0.0
    %230 = vadd.xlane.f32.xlu0 %v229
    %v231 = vpop.xlane.xlu0 %230
    %v232 = vsel %vm189, %v227, 0.0
    %233 = vadd.xlane.f32.xlu0 %v232
    %v234 = vpop.xlane.xlu0 %233
    %v235 = vsel %vm189, %v228, 0.0
    %236 = vadd.xlane.f32.xlu0 %v235
    %v237 = vpop.xlane.xlu0 %236
    %v238 = vsub.f32 %v223, %v231
    %v239 = vsub.f32 %v224, %v234
    %v240 = vsub.f32 %v225, %v237
    %s241 = smul.u32 %s119, 24
    %v242 = vadd.s32 %v147, 8
    %v243 = vadd.s32 %v147, 16
    %v244 = vstv %s241
    %v245 = vadd.s32 %v244, %v147
    %v246 = vadd.s32 %v244, %v242
    %v247 = vadd.s32 %v244, %v243
    %vm248 = vcmp.lt.s32.totalorder %v245, 24
    %vm249 = vcmp.lt.s32.totalorder %v246, 24
    %vm250 = vcmp.lt.s32.totalorder %v247, 24
    %v251 = vsel %vm248, %v238, 0.0
    %v252 = vsel %vm249, %v239, 0.0
    %v253 = vsel %vm250, %v240, 0.0
    %v254 = vsel %vm152, %v251, 0.0
    %v255 = vsel %vm152, %v252, 0.0
    %v256 = vadd.f32 %v254, %v255
    %v257 = vsel %vm152, %v253, 0.0
    %v258 = vadd.f32 %v256, %v257
    %259 = vadd.xlane.f32.xlu0 %v258
    %v260 = vpop.xlane.xlu0 %259
    %v261 = vrot.slane %v260, 4
    %v262 = vadd.f32 %v260, %v261
    %v263 = vrot.slane %v262, 2
    %v264 = vadd.f32 %v262, %v263
    %v265 = vrot.slane %v264, 1
    %v266 = vadd.f32 %v264, %v265
    %s267 = vtos %v266
    %s268 = sld [smem:[#allocation2]]
    %s269 = sadd.f32 %s268, %s162
    %s270 = scalar_lea.smem [#allocation2], 0
    %271 = sst [smem:[%s270]] %s269
    %s272 = sld [smem:[#allocation2 + $0x1]]
    %s273 = sadd.f32 %s272, %s267
    %s274 = scalar_lea.smem [#allocation2], 1
    %275 = sst [smem:[%s274]] %s273
    // Predicated region
    $region26: #{tpu_custom_call.1} parent=1 // pred_check
      %p276 = pneg %p120
    $region27: #{tpu_custom_call.1} parent=1 // pred_check_branch
      %278 = sbr.rel (%p276) target = $region29
    $region28: #{tpu_custom_call.1} parent=1 // pred_region
      %s279 = sld [smem:[#allocation2]]
      %v280 = vstv %s279
      %281 = vst [vmem:[#allocation3] sm:$0xff] %v280
      %s282 = sld [smem:[#allocation2 + $0x1]]
      %v283 = vstv %s282
      %284 = vst [vmem:[#allocation5] sm:$0xff] %v283
    $region29: #{tpu_custom_call.1} parent=1 // pred_fallthru
      _
    // Predicated region
    $region30: #{tpu_custom_call.1} parent=1 // pred_check
      _
    $region31: #{tpu_custom_call.1} parent=1 // pred_check_branch
      %286 = sbr.rel (0) target = $region33
    $region32: #{tpu_custom_call.1} parent=1 // pred_region
      %s288 = ssub.s32 128, 128
      %289 = vsyncadd [#allocation4], %s288
      %s291 = sshll.u32 [#allocation3], 4
      %s292 = int_to_ptr.vmem [resolvable:$true] %s291
      %294 = dma.vmem_to_hbm [thread:$0]  %s292, 128, %s5, [#allocation4]
    $region33: #{tpu_custom_call.1} parent=1 // pred_fallthru
      _
    // Predicated region
    $region34: #{tpu_custom_call.1} parent=1 // pred_check
      _
    $region35: #{tpu_custom_call.1} parent=1 // pred_check_branch
      %296 = sbr.rel (0) target = $region37
    $region36: #{tpu_custom_call.1} parent=1 // pred_region
      %s298 = ssub.s32 128, 128
      %299 = vsyncadd [#allocation6], %s298
      %s301 = sshll.u32 [#allocation5], 4
      %s302 = int_to_ptr.vmem [resolvable:$true] %s301
      %304 = dma.vmem_to_hbm [thread:$0]  %s302, 128, %s6, [#allocation6]
    $region37: #{tpu_custom_call.1} parent=1 // pred_fallthru
      _
    // Predicated region
    $region38: #{tpu_custom_call.1} parent=1 // pred_check
      _
    $region39: #{tpu_custom_call.1} parent=1 // pred_check_branch
      %306 = sbr.rel (0) target = $region41
    $region40: #{tpu_custom_call.1} parent=1 // pred_region
      %307 = dma.done [#allocation4], 128
    $region41: #{tpu_custom_call.1} parent=1 // pred_fallthru
      _
    // Predicated region
    $region42: #{tpu_custom_call.1} parent=1 // pred_check
      _
    $region43: #{tpu_custom_call.1} parent=1 // pred_check_branch
      %309 = sbr.rel (0) target = $region45
    $region44: #{tpu_custom_call.1} parent=1 // pred_region
      %310 = dma.done [#allocation6], 128
    $region45: #{tpu_custom_call.1} parent=1 // pred_fallthru
      _
    %311 = vsyncpa [#allocation4], 1
    %312 = vsyncpa [#allocation6], 1

</llo_original>
